<compile_context>
chip_gen: v6e
topology: v6e:2x2x1
jax: 0.10.0
libtpu: 0.0.40
codegen_flags: <defaults>
</compile_context>

<pallas_src>
import functools

import jax
import jax.numpy as jnp
from jax.experimental import pallas as pl
from jax.experimental.pallas import tpu as pltpu


def _improved_bce_kernel(s_ref, im_ref, wr_ref, out_ref, *, lam, tb):
    """One grid step: (tb, C) row block -> accumulate (8, C) partial into out_ref."""
    # Zero this split's accumulator block at its first inner step.
    @pl.when(pl.program_id(1) == 0)
    def _():
        out_ref[...] = jnp.zeros_like(out_ref)

    # Cast in-kernel; inputs arrive from HBM in their native dtype.
    s = s_ref[...].astype(jnp.float32)
    im = im_ref[...].astype(jnp.float32)
    wr = wr_ref[...].astype(jnp.float32)            # (tb, 1) per-row external weight

    C = im.shape[1]

    # Per-row class-balancing coefficients; sum(1 - im) == C - sum(im).
    sum_pos = jnp.sum(im, axis=1, keepdims=True)    # (tb, 1)
    sum_neg = jnp.float32(C) - sum_pos

    # Guarded divisions reproduce PyTorch's NaN scrub ((lam/0)*0 -> NaN -> 0)
    # at per-row granularity instead of per-element.
    a = jnp.where(sum_pos != 0.0, lam / sum_pos, 0.0)
    b = jnp.where(sum_neg != 0.0, (1.0 - lam) / sum_neg, 0.0)
    aw = wr * a
    bw = wr * b
    # Scrub NaN rows (covers NaN external weights, matching PyTorch).
    # TODO(synk): a +/-inf external weight on a row containing zero targets is
    # scrubbed element-wise by PyTorch but kept here; only diverges for
    # non-finite `weight` inputs.
    aw = jnp.where(jnp.isnan(aw), 0.0, aw)
    bw = jnp.where(jnp.isnan(bw), 0.0, bw)

    # weight = aw*im + bw*(1-im)   (1 mul + 1 add per element)
    w = bw + (aw - bw) * im

    # Stable BCE-with-logits term: max(s,0) - s*im + log1p(exp(-|s|)).
    bce = jnp.maximum(s, 0.0) - s * im + jnp.log1p(jnp.exp(-jnp.abs(s)))

    prod = w * bce                                  # (tb, C)
    # Defer the cross-lane reduction: fold tb rows onto 8 sublanes with pure
    # VALU adds; the full scalar sum happens once, outside the kernel.
    out_ref[...] += jnp.sum(prod.reshape(tb // 8, 8, C), axis=0)


def improved_bce_loss(s, im, lambda_, weight=None, *,
                      target_block_bytes=2 * 1024 * 1024, num_splits=2):
    """JAX/Pallas equivalent of ImprovedBCELoss(lambda_)(s, im, weight)."""
    B, C = im.shape
    assert s.shape == (B, C)

    if weight is not None:
        # weight.unsqueeze(2).repeat(1,1,C)[:, 1, :]  ==  broadcast of weight[:, 1]
        wr = weight[:, 1:2]                          # (B, 1), native dtype
    else:
        wr = jnp.ones((B, 1), dtype=jnp.float32)

    # Row-block size: ~target_block_bytes per (tb, C) input block, multiple of 8,
    # capped at 2048 rows and at the (8-rounded) batch.
    itemsize = max(jnp.dtype(s.dtype).itemsize, jnp.dtype(im.dtype).itemsize)
    tb = max(1, target_block_bytes // (C * itemsize))
    tb = int(max(8, min(2048, (tb // 8) * 8)))
    b8 = int(pl.cdiv(B, 8) * 8)
    tb = min(tb, b8)

    n_blocks = int(pl.cdiv(B, tb))
    ns = int(num_splits) if n_blocks >= int(num_splits) else 1   # v7x: 2 TCs
    n_blocks = int(pl.cdiv(n_blocks, ns) * ns)
    n_inner = n_blocks // ns
    Bp = n_blocks * tb

    if Bp != B:
        pad = Bp - B
        # Padded rows: s=0, im=0, wr=0  ->  contribute exactly 0 to the loss.
        s = jnp.pad(s, ((0, pad), (0, 0)))
        im = jnp.pad(im, ((0, pad), (0, 0)))
        wr = jnp.pad(wr, ((0, pad), (0, 0)))

    kernel = functools.partial(_improved_bce_kernel, lam=float(lambda_), tb=tb)

    in_block_bytes = tb * C * (jnp.dtype(s.dtype).itemsize + jnp.dtype(im.dtype).itemsize)
    # 2x pipeline buffers for the inputs + f32 in-kernel temporaries + slack.
    vmem_est = 2 * in_block_bytes + 8 * tb * C * 4 + (2 << 20)
    vmem_limit = int(min(max(vmem_est, 32 << 20), 64 << 20))

    cost = pl.CostEstimate(
        flops=12 * Bp * C,
        transcendentals=2 * Bp * C,
        bytes_accessed=(Bp * C * (jnp.dtype(s.dtype).itemsize + jnp.dtype(im.dtype).itemsize)
                        + Bp * jnp.dtype(wr.dtype).itemsize + ns * 8 * C * 4),
    )

    out = pl.pallas_call(
        kernel,
        out_shape=jax.ShapeDtypeStruct((ns * 8, C), jnp.float32),
        grid_spec=pltpu.PrefetchScalarGridSpec(
            num_scalar_prefetch=0,
            grid=(ns, n_inner),
            in_specs=[
                pl.BlockSpec((tb, C), lambda c, i: (c * n_inner + i, 0)),
                pl.BlockSpec((tb, C), lambda c, i: (c * n_inner + i, 0)),
                pl.BlockSpec((tb, 1), lambda c, i: (c * n_inner + i, 0)),
            ],
            out_specs=pl.BlockSpec((8, C), lambda c, i: (c, 0)),
        ),
        compiler_params=pltpu.CompilerParams(
            dimension_semantics=("parallel", "arbitrary"),
            vmem_limit_bytes=vmem_limit,
        ),
        cost_estimate=cost,
    )(s, im, wr)

    # Tiny final reduction (ns*8 x C) done by XLA.
    return jnp.sum(out)


def _reference(s, im, lambda_, weight=None):
    """Pure-JAX mirror of the PyTorch forward."""
    s = s.astype(jnp.float32)
    im = im.astype(jnp.float32)
    w1 = lambda_ / jnp.sum(im, axis=1, keepdims=True) * im
    w2 = (1.0 - lambda_) / jnp.sum(1.0 - im, axis=1, keepdims=True) * (1.0 - im)
    if weight is not None:
        wr = weight[:, 1:2].astype(jnp.float32)
        w1 = wr * w1
        w2 = wr * w2
    w1 = jnp.where(jnp.isnan(w1), 0.0, w1)
    w2 = jnp.where(jnp.isnan(w2), 0.0, w2)
    bce = jnp.maximum(s, 0.0) - s * im + jnp.log1p(jnp.exp(-jnp.abs(s)))
    return jnp.sum(w1 * bce) + jnp.sum(w2 * bce)


if __name__ == "__main__":
    key = jax.random.PRNGKey(0)
    k1, k2, k3, k4, k5, k6 = jax.random.split(key, 6)

    B, C = 16, 256
    lambda_ = 0.7

    s = jax.random.normal(k1, (B, C), dtype=jnp.float32)          # logits
    im = jax.random.uniform(k2, (B, C), dtype=jnp.float32)        # soft targets in [0,1]
    im = im.at[0].set(0.0)          # all-zero target row exercises the NaN-scrub path
    weight = jax.random.uniform(k3, (B, 2), dtype=jnp.float32)    # optional per-row weight

    # weight=None path
    loss = jax.block_until_ready(improved_bce_loss(s, im, lambda_))
    ref = _reference(s, im, lambda_)
    assert jnp.allclose(loss, ref, rtol=1e-5, atol=1e-4), (loss, ref)

    # weight provided path
    loss_w = jax.block_until_ready(improved_bce_loss(s, im, lambda_, weight=weight))
    ref_w = _reference(s, im, lambda_, weight=weight)
    assert jnp.allclose(loss_w, ref_w, rtol=1e-5, atol=1e-4), (loss_w, ref_w)

    # Ragged batch + bf16 inputs (padding path; in-kernel cast, no wrapper copy).
    B2, C2 = 13, 128
    s2 = jax.random.normal(k4, (B2, C2), dtype=jnp.bfloat16)
    im2 = jax.random.uniform(k5, (B2, C2), dtype=jnp.bfloat16)
    w2 = jax.random.uniform(k6, (B2, 2), dtype=jnp.float32)
    loss2 = jax.block_until_ready(improved_bce_loss(s2, im2, lambda_, weight=w2))
    ref2 = _reference(s2, im2, lambda_, weight=w2)
    assert jnp.allclose(loss2, ref2, rtol=1e-4, atol=1e-3), (loss2, ref2)

    print("KERNEL_OK")
</pallas_src>

<mosaic_0001>
module attributes {stable_mosaic.version = 11 : i64} {
  func.func @_improved_bce_kernel(%arg0: i32, %arg1: i32, %arg2: memref<16x256xf32, #tpu.memory_space<vmem>>, %arg3: memref<16x256xf32, #tpu.memory_space<vmem>>, %arg4: memref<16x1xf32, #tpu.memory_space<vmem>>, %arg5: memref<8x256xf32, #tpu.memory_space<vmem>>) attributes {dimension_semantics = [#tpu.dimension_semantics<parallel>, #tpu.dimension_semantics<arbitrary>], iteration_bounds = array<i64: 1, 1>, scalar_prefetch = 0 : i64, scratch_operands = 0 : i64, tpu.core_type = #tpu.core_type<tc>, window_params = [{transform_indices = @transform_0, window_bounds = array<i64: 16, 256>}, {transform_indices = @transform_1, window_bounds = array<i64: 16, 256>}, {transform_indices = @transform_2, window_bounds = array<i64: 16, 1>}, {transform_indices = @transform_3, window_bounds = array<i64: 8, 256>}]} {
    %c0_i32 = arith.constant 0 : i32
    %0 = arith.cmpi eq, %arg1, %c0_i32 : i32
    %1 = arith.extui %0 : i1 to i32
    %c0_i32_0 = arith.constant 0 : i32
    %2 = arith.cmpi ne, %1, %c0_i32_0 : i32
    scf.if %2 {
      %cst_22 = arith.constant 0.000000e+00 : f32
      %51 = vector.broadcast %cst_22 : f32 to vector<8x256xf32>
      %c0_23 = arith.constant 0 : index
      %c0_24 = arith.constant 0 : index
      %52 = vector.load %arg5[%c0_23, %c0_24] : memref<8x256xf32, #tpu.memory_space<vmem>>, vector<8x256xf32>
      tpu.vector_store %arg5[%c0_23, %c0_24], %51 {strides = array<i32>} : memref<8x256xf32, #tpu.memory_space<vmem>>, vector<8x256xf32>,
    } else {
    }
    %c0 = arith.constant 0 : index
    %c0_1 = arith.constant 0 : index
    %3 = vector.load %arg2[%c0, %c0_1] : memref<16x256xf32, #tpu.memory_space<vmem>>, vector<16x256xf32>
    %c0_2 = arith.constant 0 : index
    %c0_3 = arith.constant 0 : index
    %4 = vector.load %arg3[%c0_2, %c0_3] : memref<16x256xf32, #tpu.memory_space<vmem>>, vector<16x256xf32>
    %c0_4 = arith.constant 0 : index
    %c0_5 = arith.constant 0 : index
    %5 = vector.load %arg4[%c0_4, %c0_5] : memref<16x1xf32, #tpu.memory_space<vmem>>, vector<16x1xf32>
    %cst = arith.constant dense<0.000000e+00> : vector<16xf32>
    %6 = vector.multi_reduction <add>, %4, %cst [1] : vector<16x256xf32> to vector<16xf32>
    %7 = vector.shape_cast %6 : vector<16xf32> to vector<16x1xf32>
    %cst_6 = arith.constant 2.560000e+02 : f32
    %8 = vector.broadcast %cst_6 : f32 to vector<16x1xf32>
    %9 = arith.subf %8, %7 : vector<16x1xf32>
    %cst_7 = arith.constant 0.000000e+00 : f32
    %10 = vector.broadcast %cst_7 : f32 to vector<16x1xf32>
    %11 = arith.cmpf one, %7, %10 : vector<16x1xf32>
    %cst_8 = arith.constant 0.699999988 : f32
    %12 = vector.broadcast %cst_8 : f32 to vector<16x1xf32>
    %13 = arith.divf %12, %7 : vector<16x1xf32>
    %cst_9 = arith.constant 0.000000e+00 : f32
    %14 = vector.broadcast %cst_9 : f32 to vector<16x1xf32>
    %15 = arith.select %11, %13, %14 : vector<16x1xi1>, vector<16x1xf32>
    %cst_10 = arith.constant 0.000000e+00 : f32
    %16 = vector.broadcast %cst_10 : f32 to vector<16x1xf32>
    %17 = arith.cmpf one, %9, %16 : vector<16x1xf32>
    %cst_11 = arith.constant 3.000000e-01 : f32
    %18 = vector.broadcast %cst_11 : f32 to vector<16x1xf32>
    %19 = arith.divf %18, %9 : vector<16x1xf32>
    %cst_12 = arith.constant 0.000000e+00 : f32
    %20 = vector.broadcast %cst_12 : f32 to vector<16x1xf32>
    %21 = arith.select %17, %19, %20 : vector<16x1xi1>, vector<16x1xf32>
    %22 = arith.mulf %5, %15 : vector<16x1xf32>
    %23 = arith.mulf %5, %21 : vector<16x1xf32>
    %24 = arith.cmpf one, %22, %22 : vector<16x1xf32>
    %cst_13 = arith.constant 0.000000e+00 : f32
    %25 = vector.broadcast %cst_13 : f32 to vector<16x1xf32>
    %26 = arith.select %24, %25, %22 : vector<16x1xi1>, vector<16x1xf32>
    %27 = arith.cmpf one, %23, %23 : vector<16x1xf32>
    %cst_14 = arith.constant 0.000000e+00 : f32
    %28 = vector.broadcast %cst_14 : f32 to vector<16x1xf32>
    %29 = arith.select %27, %28, %23 : vector<16x1xi1>, vector<16x1xf32>
    %30 = arith.subf %26, %29 : vector<16x1xf32>
    %31 = vector.broadcast %30 : vector<16x1xf32> to vector<16x256xf32>
    %32 = arith.mulf %31, %4 : vector<16x256xf32>
    %33 = vector.broadcast %29 : vector<16x1xf32> to vector<16x256xf32>
    %34 = arith.addf %33, %32 : vector<16x256xf32>
    %cst_15 = arith.constant 0.000000e+00 : f32
    %35 = vector.broadcast %cst_15 : f32 to vector<16x256xf32>
    %36 = arith.maximumf %3, %35 : vector<16x256xf32>
    %37 = arith.mulf %3, %4 : vector<16x256xf32>
    %38 = arith.subf %36, %37 : vector<16x256xf32>
    %39 = math.absf %3 : vector<16x256xf32>
    %cst_16 = arith.constant 0.000000e+00 : f32
    %40 = vector.broadcast %cst_16 : f32 to vector<16x256xf32>
    %41 = arith.subf %40, %39 : vector<16x256xf32>
    %42 = math.exp %41 : vector<16x256xf32>
    %43 = math.log1p %42 : vector<16x256xf32>
    %44 = arith.addf %38, %43 : vector<16x256xf32>
    %45 = arith.mulf %34, %44 : vector<16x256xf32>
    %c0_17 = arith.constant 0 : index
    %c0_18 = arith.constant 0 : index
    %46 = vector.load %arg5[%c0_17, %c0_18] : memref<8x256xf32, #tpu.memory_space<vmem>>, vector<8x256xf32>
    %47 = vector.shape_cast %45 : vector<16x256xf32> to vector<2x8x256xf32>
    %cst_19 = arith.constant dense<0.000000e+00> : vector<8x256xf32>
    %48 = vector.multi_reduction <add>, %47, %cst_19 [0] : vector<2x8x256xf32> to vector<8x256xf32>
    %49 = arith.addf %46, %48 : vector<8x256xf32>
    %c0_20 = arith.constant 0 : index
    %c0_21 = arith.constant 0 : index
    %50 = vector.load %arg5[%c0_20, %c0_21] : memref<8x256xf32, #tpu.memory_space<vmem>>, vector<8x256xf32>
    tpu.vector_store %arg5[%c0_20, %c0_21], %49 {strides = array<i32>} : memref<8x256xf32, #tpu.memory_space<vmem>>, vector<8x256xf32>,
    return
  }
  func.func @transform_0(%arg0: i32, %arg1: i32) -> (i32, i32) {
    %c1_i32 = arith.constant 1 : i32
    %0 = arith.muli %arg0, %c1_i32 : i32
    %1 = arith.addi %0, %arg1 : i32
    %c0_i32 = arith.constant 0 : i32
    %c0_i32_0 = arith.constant 0 : i32
    return %1, %c0_i32 : i32, i32
  }
  func.func @transform_1(%arg0: i32, %arg1: i32) -> (i32, i32) {
    %c1_i32 = arith.constant 1 : i32
    %0 = arith.muli %arg0, %c1_i32 : i32
    %1 = arith.addi %0, %arg1 : i32
    %c0_i32 = arith.constant 0 : i32
    %c0_i32_0 = arith.constant 0 : i32
    return %1, %c0_i32 : i32, i32
  }
  func.func @transform_2(%arg0: i32, %arg1: i32) -> (i32, i32) {
    %c1_i32 = arith.constant 1 : i32
    %0 = arith.muli %arg0, %c1_i32 : i32
    %1 = arith.addi %0, %arg1 : i32
    %c0_i32 = arith.constant 0 : i32
    %c0_i32_0 = arith.constant 0 : i32
    return %1, %c0_i32 : i32, i32
  }
  func.func @transform_3(%arg0: i32, %arg1: i32) -> (i32, i32) {
    %c0_i32 = arith.constant 0 : i32
    %c0_i32_0 = arith.constant 0 : i32
    return %arg0, %c0_i32 : i32, i32
  }
}

</mosaic_0001>

<llo_original>
// kernel: tpu_custom_call.1
$region0: #{tpu_custom_call.1}
  #allocation0 [shape = 'u32[]', space=smem, size = 0x4, offset = 0x4, fixed_abs, tag = 'smem constant byte address 0x4 - core index']
  #allocation1 [shape = 'u32[144,128]{1,0:T(1,128)}', space=vmem, size = 0x12000, scoped, tag = 'internal scratch']
  %s0 = inlined_call_operand.hbm [shape: f32[16,256], index: 0, kind: input, shape index: {}]
  %s1 = inlined_call_operand.hbm [shape: f32[16,256], index: 1, kind: input, shape index: {}]
  %s2 = inlined_call_operand.vmem [shape: f32[16,1], index: 2, kind: input, shape index: {}]
  %s3 = inlined_call_operand.hbm [shape: f32[8,256], index: 3, kind: output, shape index: {}]
  %s4 = sld [smem:[#allocation0]]
  $region34: #{tpu_custom_call.1} parent=0
    _
  %s6 = ssub.s32 1, %s4
  %s7 = scalar_select 0, %s6, %s4
  $region1: #{tpu_custom_call.1} parent=0
    #allocation2 [shape = 'u8[16384]{0}', space=vmem, size = 0x4000, scoped, tag = 'input window, operand 0, single buffered']
    #allocation3 [shape = 's32[1]{0}', space=sflag, size = 0x4, scoped, tag = 'scoped memory for tpu_custom_call.1']
    #allocation4 [shape = 's32[1]{0}', space=sflag, size = 0x4, scoped, tag = 'scoped memory for tpu_custom_call.1']
    #allocation5 [shape = 'u8[16384]{0}', space=vmem, size = 0x4000, scoped, tag = 'input window, operand 1, single buffered']
    #allocation6 [shape = 's32[1]{0}', space=sflag, size = 0x4, scoped, tag = 'scoped memory for tpu_custom_call.1']
    #allocation7 [shape = 'u8[8192]{0}', space=vmem, size = 0x2000, scoped, tag = 'output window, operand 0, single buffered']
    %8 = vsyncpa [#allocation3], 0
    %9 = vsyncpa [#allocation6], 0
    %10 = vsyncpa [#allocation4], 0
    // Predicated region
    $region2: #{tpu_custom_call.1} parent=1 // pred_check
      _
    $region3: #{tpu_custom_call.1} parent=1 // pred_check_branch
      %12 = sbr.rel (0) target = $region5
    $region4: #{tpu_custom_call.1} parent=1 // pred_region
      %s13 = sadd.s32 0, 0
      %s14 = smul.u32 2, %s13
      %s16 = ssub.s32 512, 512
      %17 = vsyncadd [#allocation3], %s16
      %s18 = smul.addr %s14, 2
      %s19 = smul.addr %s18, 128
      %s20 = scalar_lea.hbm %s0, %s19
      %s21 = sshll.u32 [#allocation2], 4
      %s22 = int_to_ptr.vmem [resolvable:$true] %s21
      %27 = dma.hbm_to_vmem [thread:$0]  %s20, 512, %s22, [#allocation3], 256, 256, 16
    $region5: #{tpu_custom_call.1} parent=1 // pred_fallthru
      _
    // Predicated region
    $region6: #{tpu_custom_call.1} parent=1 // pred_check
      _
    $region7: #{tpu_custom_call.1} parent=1 // pred_check_branch
      %29 = sbr.rel (0) target = $region9
    $region8: #{tpu_custom_call.1} parent=1 // pred_region
      %s30 = sadd.s32 0, 0
      %s31 = smul.u32 2, %s30
      %s33 = ssub.s32 512, 512
      %34 = vsyncadd [#allocation6], %s33
      %s35 = smul.addr %s31, 2
      %s36 = smul.addr %s35, 128
      %s37 = scalar_lea.hbm %s1, %s36
      %s38 = sshll.u32 [#allocation5], 4
      %s39 = int_to_ptr.vmem [resolvable:$true] %s38
      %44 = dma.hbm_to_vmem [thread:$0]  %s37, 512, %s39, [#allocation6], 256, 256, 16
    $region9: #{tpu_custom_call.1} parent=1 // pred_fallthru
      _
    // Predicated region
    $region10: #{tpu_custom_call.1} parent=1 // pred_check
      _
    $region11: #{tpu_custom_call.1} parent=1 // pred_check_branch
      %46 = sbr.rel (0) target = $region13
    $region12: #{tpu_custom_call.1} parent=1 // pred_region
      %s47 = sadd.s32 0, 0
      %s48 = smul.u32 2, %s47
      %p49 = scmp.lt.s32.totalorder %s48, 1
      %s50 = scalar_select %p49, %s48, 1
      %s51 = smul.addr %s50, 8
      %s52 = scalar_lea.vmem %s2, %s51
      %s53 = sadd.s32 0, 0
      %s54 = smul.u32 2, %s53
    $region13: #{tpu_custom_call.1} parent=1 // pred_fallthru
      _
    // Predicated region
    $region14: #{tpu_custom_call.1} parent=1 // pred_check
      _
    $region15: #{tpu_custom_call.1} parent=1 // pred_check_branch
      %56 = sbr.rel (0) target = $region17
    $region16: #{tpu_custom_call.1} parent=1 // pred_region
      %57 = dma.done [#allocation3], 512
    $region17: #{tpu_custom_call.1} parent=1 // pred_fallthru
      _
    // Predicated region
    $region18: #{tpu_custom_call.1} parent=1 // pred_check
      _
    $region19: #{tpu_custom_call.1} parent=1 // pred_check_branch
      %59 = sbr.rel (0) target = $region21
    $region20: #{tpu_custom_call.1} parent=1 // pred_region
      %60 = dma.done [#allocation6], 512
    $region21: #{tpu_custom_call.1} parent=1 // pred_fallthru
      _
    %s61 = sadd.s32 0, 0
    %s62 = smul.u32 2, %s61
    %p63 = scmp.lt.s32.totalorder %s62, 1
    %s64 = scalar_select %p63, %s62, 1
    %s65 = smul.addr %s64, 8
    %s66 = scalar_lea.vmem %s2, %s65
    %s67 = sadd.s32 0, 0
    %s68 = smul.u32 2, %s67
    %s69 = sadd.s32 0, 0
    %s70 = smul.u32 2, %s69
    %s71 = sadd.s32 0, 0
    %s72 = smul.u32 2, %s71
    %p73 = scmp.lt.s32.totalorder %s72, 1
    %s74 = scalar_select %p73, %s72, 1
    %s75 = smul.addr %s74, 8
    %s76 = scalar_lea.vmem %s2, %s75
    %s77 = sadd.s32 0, 0
    %s78 = smul.u32 2, %s77
    %p79 = scmp.eq.s32.totalorder 0, 0
    // Predicated region
    $region22: #{tpu_custom_call.1} parent=1 // pred_check
      %p80 = pneg %p79
    $region23: #{tpu_custom_call.1} parent=1 // pred_check_branch
      %82 = sbr.rel (%p80) target = $region25
    $region24: #{tpu_custom_call.1} parent=1 // pred_region
      %83 = vst [vmem:[#allocation7] sm:$0xff] 0.0
      %84 = vst [vmem:[#allocation7 + $0x8] sm:$0xff] 0.0
    $region25: #{tpu_custom_call.1} parent=1 // pred_fallthru
      _
    %v85 = vld [vmem:[#allocation2] sm:$0xff]
    %v86 = vld [vmem:[#allocation2 + $0x8] sm:$0xff]
    %v87 = vld [vmem:[#allocation2 + $0x10] sm:$0xff]
    %v88 = vld [vmem:[#allocation2 + $0x18] sm:$0xff]
    %v89 = vld [vmem:[#allocation5] sm:$0xff]
    %v90 = vld [vmem:[#allocation5 + $0x8] sm:$0xff]
    %v91 = vld [vmem:[#allocation5 + $0x10] sm:$0xff]
    %v92 = vld [vmem:[#allocation5 + $0x18] sm:$0xff]
    %v93 = vld [vmem:[%s76] sm:$0xff]
    %v94 = vld [vmem:[%s76 + $0x8] sm:$0xff]
    %v95 = vadd.f32 %v89, %v90
    %96 = vadd.xlane.f32.xlu0 %v95
    %v97 = vpop.xlane.xlu0 %96
    %v98 = vadd.f32 %v91, %v92
    %99 = vadd.xlane.f32.xlu0 %v98
    %v100 = vpop.xlane.xlu0 %99
    %v101 = vsub.f32 256.0, %v97
    %v102 = vsub.f32 256.0, %v100
    %vm103 = vcmp.ne.f32.partialorder %v97, 0.0
    %vm104 = vcmp.ne.f32.partialorder %v100, 0.0
    %v105 = vrcp.pop %v97
    %v106 = vmul.f32 0.7, %v105
    %v107 = vrcp.pop %v100
    %v108 = vmul.f32 0.7, %v107
    %v109 = vsel %vm103, %v106, 0.0
    %v110 = vsel %vm104, %v108, 0.0
    %vm111 = vcmp.ne.f32.partialorder %v101, 0.0
    %vm112 = vcmp.ne.f32.partialorder %v102, 0.0
    %v113 = vrcp.pop %v101
    %v114 = vmul.f32 0.3, %v113
    %v115 = vrcp.pop %v102
    %v116 = vmul.f32 0.3, %v115
    %v117 = vsel %vm111, %v114, 0.0
    %v118 = vsel %vm112, %v116, 0.0
    %v119 = vmul.f32 %v93, %v109
    %v120 = vmul.f32 %v94, %v110
    %v121 = vmul.f32 %v93, %v117
    %v122 = vmul.f32 %v94, %v118
    %vm123 = vcmp.ne.f32.partialorder %v119, %v119
    %vm124 = vcmp.ne.f32.partialorder %v120, %v120
    %v125 = vsel %vm123, 0.0, %v119
    %v126 = vsel %vm124, 0.0, %v120
    %vm127 = vcmp.ne.f32.partialorder %v121, %v121
    %vm128 = vcmp.ne.f32.partialorder %v122, %v122
    %v129 = vsel %vm127, 0.0, %v121
    %v130 = vsel %vm128, 0.0, %v122
    %v131 = vsub.f32 %v125, %v129
    %v132 = vsub.f32 %v126, %v130
    %134 = vset.pattern.permute.xlu0 0
    %135 = vperm.xlu0 %134, %v131
    %v136 = vpop.permute.xlu0 %135
    %139 = vset.pattern.permute.xlu0 0
    %140 = vperm.xlu0 %139, %v132
    %v141 = vpop.permute.xlu0 %140
    %v143 = vmul.f32 %v136, %v89
    %v144 = vmul.f32 %v136, %v90
    %v145 = vmul.f32 %v141, %v91
    %v146 = vmul.f32 %v141, %v92
    %148 = vset.pattern.permute.xlu0 0
    %149 = vperm.xlu0 %148, %v129
    %v150 = vpop.permute.xlu0 %149
    %153 = vset.pattern.permute.xlu0 0
    %154 = vperm.xlu0 %153, %v130
    %v155 = vpop.permute.xlu0 %154
    %v157 = vadd.f32 %v150, %v143
    %v158 = vadd.f32 %v150, %v144
    %v159 = vadd.f32 %v155, %v145
    %v160 = vadd.f32 %v155, %v146
    %v161 = vmax.f32 %v85, 0.0
    %v162 = vmax.f32 %v86, 0.0
    %v163 = vmax.f32 %v87, 0.0
    %v164 = vmax.f32 %v88, 0.0
    %v165 = vmul.f32 %v85, %v89
    %v166 = vmul.f32 %v86, %v90
    %v167 = vmul.f32 %v87, %v91
    %v168 = vmul.f32 %v88, %v92
    %v169 = vsub.f32 %v161, %v165
    %v170 = vsub.f32 %v162, %v166
    %v171 = vsub.f32 %v163, %v167
    %v172 = vsub.f32 %v164, %v168
    %v173 = vand.u32 2147483647, %v85
    %v174 = vand.u32 2147483647, %v86
    %v175 = vand.u32 2147483647, %v87
    %v176 = vand.u32 2147483647, %v88
    %v177 = vsub.f32 0.0, %v173
    %v178 = vsub.f32 0.0, %v174
    %v179 = vsub.f32 0.0, %v175
    %v180 = vsub.f32 0.0, %v176
    %v181 = vmul.f32 %v177, 1.442695
    %v182 = vpow.pop %v181
    %v183 = vmul.f32 %v178, 1.442695
    %v184 = vpow.pop %v183
    %v185 = vmul.f32 %v179, 1.442695
    %v186 = vpow.pop %v185
    %v187 = vmul.f32 %v180, 1.442695
    %v188 = vpow.pop %v187
    %v189 = vadd.f32 %v182, 1.0
    %v190 = vlog2.pop %v189
    %v191 = vmul.f32 %v190, 0.6931472
    %v192 = vmul.f32 -0.5, %v182
    %v193 = vadd.f32 %v192, 1.0
    %v194 = vmul.f32 %v193, %v182
    %v195 = vand.u32 2147483647, %v182
    %vm196 = vcmp.lt.f32.partialorder %v195, 0.0004427343
    %v197 = vsel %vm196, %v194, %v191
    %v198 = vadd.f32 %v184, 1.0
    %v199 = vlog2.pop %v198
    %v200 = vmul.f32 %v199, 0.6931472
    %v201 = vmul.f32 -0.5, %v184
    %v202 = vadd.f32 %v201, 1.0
    %v203 = vmul.f32 %v202, %v184
    %v204 = vand.u32 2147483647, %v184
    %vm205 = vcmp.lt.f32.partialorder %v204, 0.0004427343
    %v206 = vsel %vm205, %v203, %v200
    %v207 = vadd.f32 %v186, 1.0
    %v208 = vlog2.pop %v207
    %v209 = vmul.f32 %v208, 0.6931472
    %v210 = vmul.f32 -0.5, %v186
    %v211 = vadd.f32 %v210, 1.0
    %v212 = vmul.f32 %v211, %v186
    %v213 = vand.u32 2147483647, %v186
    %vm214 = vcmp.lt.f32.partialorder %v213, 0.0004427343
    %v215 = vsel %vm214, %v212, %v209
    %v216 = vadd.f32 %v188, 1.0
    %v217 = vlog2.pop %v216
    %v218 = vmul.f32 %v217, 0.6931472
    %v219 = vmul.f32 -0.5, %v188
    %v220 = vadd.f32 %v219, 1.0
    %v221 = vmul.f32 %v220, %v188
    %v222 = vand.u32 2147483647, %v188
    %vm223 = vcmp.lt.f32.partialorder %v222, 0.0004427343
    %v224 = vsel %vm223, %v221, %v218
    %v225 = vadd.f32 %v169, %v197
    %v226 = vadd.f32 %v170, %v206
    %v227 = vadd.f32 %v171, %v215
    %v228 = vadd.f32 %v172, %v224
    %v229 = vmul.f32 %v157, %v225
    %v230 = vmul.f32 %v158, %v226
    %v231 = vmul.f32 %v159, %v227
    %v232 = vmul.f32 %v160, %v228
    %v233 = vld [vmem:[#allocation7] sm:$0xff]
    %v234 = vld [vmem:[#allocation7 + $0x8] sm:$0xff]
    %v235 = vadd.f32 %v229, %v231
    %v236 = vadd.f32 %v230, %v232
    %v237 = vadd.f32 %v233, %v235
    %v238 = vadd.f32 %v234, %v236
    %239 = vst [vmem:[#allocation7] sm:$0xff] %v237
    %240 = vst [vmem:[#allocation7 + $0x8] sm:$0xff] %v238
    // Predicated region
    $region26: #{tpu_custom_call.1} parent=1 // pred_check
      _
    $region27: #{tpu_custom_call.1} parent=1 // pred_check_branch
      %242 = sbr.rel (0) target = $region29
    $region28: #{tpu_custom_call.1} parent=1 // pred_region
      %s244 = ssub.s32 256, 256
      %245 = vsyncadd [#allocation4], %s244
      %s247 = sshll.u32 [#allocation7], 4
      %s248 = int_to_ptr.vmem [resolvable:$true] %s247
      %250 = dma.vmem_to_hbm [thread:$0]  %s248, 256, %s3, [#allocation4]
    $region29: #{tpu_custom_call.1} parent=1 // pred_fallthru
      _
    // Predicated region
    $region30: #{tpu_custom_call.1} parent=1 // pred_check
      _
    $region31: #{tpu_custom_call.1} parent=1 // pred_check_branch
      %252 = sbr.rel (0) target = $region33
    $region32: #{tpu_custom_call.1} parent=1 // pred_region
      %253 = dma.done [#allocation4], 256
    $region33: #{tpu_custom_call.1} parent=1 // pred_fallthru
      _
    %254 = vsyncpa [#allocation3], 1
    %255 = vsyncpa [#allocation6], 1
    %256 = vsyncpa [#allocation4], 1

</llo_original>
